<compile_context>
chip_gen: v6e
topology: v6e:2x2x1
jax: 0.10.0
libtpu: 0.0.40
codegen_flags: <defaults>
</compile_context>

<pallas_src>
import jax
import jax.numpy as jnp
from jax.experimental import pallas as pl
from jax.experimental.pallas import tpu as pltpu


def _pooler_kernel(x_ref, w_ref, b_ref, o_ref):
    # x_ref: (B, s_blk, H) leading-sequence block (resident); only token 0 used.
    # w_ref: (H, TN)  pre-transposed weight tile (columns of W.T), native dtype.
    # b_ref: (1, TN)  bias tile.
    # o_ref: (B, TN)  output tile.
    x = x_ref[:, 0, :]                       # (B, H) first-token activations
    w = w_ref[...]
    # f32 operands: full-precision MXU passes (free at the HBM roofline) so the
    # result matches PyTorch f32 numerics; bf16 stays native-dtype on the MXU.
    prec = (jax.lax.Precision.HIGHEST
            if (x.dtype == jnp.float32 and w.dtype == jnp.float32) else None)
    acc = jnp.dot(x, w, preferred_element_type=jnp.float32, precision=prec)
    # Epilogue in f32: bias add (VPU) + tanh (EUP); single cast on store.
    y = acc + b_ref[...].astype(jnp.float32)
    o_ref[...] = jnp.tanh(y).astype(o_ref.dtype)


def prepare_bart_pooler_params(weight, bias):
    """One-time (init-time) parameter prep for the pooler kernel.

    weight: (H_out, H_in) PyTorch nn.Linear layout -> W^T with shape (H_in, H_out)
    bias:   (H,)                                    -> (1, H)
    Call once when loading parameters, NOT per forward call.
    """
    return weight.T, bias.reshape(1, -1)


def _num_tensorcores():
    # v7x exposes two TensorCores per chip; v5e/v6e are single-TC parts.
    try:
        kind = jax.devices()[0].device_kind.lower()
        if "7" in kind:
            return 2
    except Exception:
        pass
    return 1


def _pick_tile_n(H, num_tc):
    # Multi-TC part: split the weight columns into exactly `num_tc` balanced,
    # lane-dense (128-multiple) tiles so each TC reads an even share of W.
    if num_tc >= 2:
        tn = H // num_tc
        if tn >= 128 and tn % 128 == 0 and tn * num_tc == H:
            return tn
    # Single-TC part (or awkward H): one whole-weight block, grid=(1,).
    return H


def bart_pooler(hidden_states, w_t, bias2d):
    """hidden_states: (B, S, H); w_t: (H_in, H_out) = W.T; bias2d: (1, H) -> (B, H)."""
    B, S, H = hidden_states.shape
    out_dtype = hidden_states.dtype

    tn = _pick_tile_n(H, _num_tensorcores())
    n_tiles = H // tn

    # First-token read folded into the BlockSpec: sublane-legal block over the
    # leading (up to) 8 sequence positions; the kernel uses only position 0.
    s_blk = 8 if S >= 8 else S

    def _isz(a):
        return jnp.dtype(a.dtype).itemsize

    x_bytes = B * s_blk * H * _isz(hidden_states)
    w_bytes = H * tn * _isz(w_t)
    b_bytes = tn * _isz(bias2d)
    o_bytes = B * tn * jnp.dtype(out_dtype).itemsize
    # Double-buffer headroom on every operand; cap below v7x's 32 MiB scoped
    # default (64 MiB physical) to leave room for neighboring fusions.
    est = 2 * (x_bytes + w_bytes + b_bytes + o_bytes)
    vmem_limit = int(min(28 * 2**20, max(4 * 2**20, 2 * est)))

    cost = pl.CostEstimate(
        flops=2 * B * H * H,
        transcendentals=B * H,
        bytes_accessed=(H * H * _isz(w_t)
                        + B * s_blk * H * _isz(hidden_states)
                        + B * H * jnp.dtype(out_dtype).itemsize
                        + H * _isz(bias2d)),
    )

    # TODO(synk): mark the resident hidden_states block pipeline_mode=pl.Buffered(1)
    # (constant index map needs no double buffer) once single-buffer mode is
    # confirmed supported on all targeted jax versions; saving is only O(B*H).
    return pl.pallas_call(
        _pooler_kernel,
        out_shape=jax.ShapeDtypeStruct((B, H), out_dtype),
        grid_spec=pltpu.PrefetchScalarGridSpec(
            num_scalar_prefetch=0,
            grid=(n_tiles,),
            in_specs=[
                # hidden_states: constant index -> fetched once, stays resident.
                pl.BlockSpec((B, s_blk, H), lambda j: (0, 0, 0)),
                # weight columns j*TN : (j+1)*TN of W.T (pre-transposed at init).
                pl.BlockSpec((H, tn), lambda j: (0, j)),
                # matching bias tile.
                pl.BlockSpec((1, tn), lambda j: (0, j)),
            ],
            out_specs=pl.BlockSpec((B, tn), lambda j: (0, j)),
        ),
        compiler_params=pltpu.CompilerParams(
            # Column tiles are independent -> megacore split on v7x; harmless
            # on single-TC parts where the grid collapses to (1,).
            dimension_semantics=("parallel",),
            vmem_limit_bytes=vmem_limit,
        ),
        cost_estimate=cost,
    )(hidden_states, w_t, bias2d)


if __name__ == "__main__":
    B, S, H = 2, 8, 32  # small shapes consistent with BartPooler's forward

    key = jax.random.PRNGKey(0)
    k_hs, k_w, k_b = jax.random.split(key, 3)

    hidden_states = jax.random.normal(k_hs, (B, S, H), dtype=jnp.float32)
    # Deterministic synthetic Linear(hidden_size, hidden_size) parameters.
    weight = jax.random.normal(k_w, (H, H), dtype=jnp.float32) * 0.02
    bias = jax.random.normal(k_b, (H,), dtype=jnp.float32) * 0.02

    # One-time parameter prep (init time) -> no per-call transpose traffic.
    w_t, b2 = prepare_bart_pooler_params(weight, bias)
    w_t, b2 = jax.block_until_ready(w_t), jax.block_until_ready(b2)

    # f32 path (matches the original PyTorch module numerics).
    out = jax.block_until_ready(bart_pooler(hidden_states, w_t, b2))
    ref = jnp.tanh(hidden_states[:, 0, :] @ weight.T + bias)
    assert out.shape == (B, H)
    assert jnp.allclose(out, ref, atol=1e-5, rtol=1e-5)

    # Short-sequence path (S < 8) exercises the full-S sublane block fallback.
    hs_short = hidden_states[:, :4, :]
    out_short = jax.block_until_ready(bart_pooler(hs_short, w_t, b2))
    assert jnp.allclose(out_short, ref, atol=1e-5, rtol=1e-5)

    # bf16 path: operands stay bf16 on the MXU, accumulation/epilogue in f32.
    hs_bf16 = hidden_states.astype(jnp.bfloat16)
    w_t_bf16, b2_bf16 = prepare_bart_pooler_params(
        weight.astype(jnp.bfloat16), bias.astype(jnp.bfloat16))
    out_bf16 = jax.block_until_ready(bart_pooler(hs_bf16, w_t_bf16, b2_bf16))
    ref_bf16 = jnp.tanh(
        hs_bf16[:, 0, :].astype(jnp.float32) @ w_t_bf16.astype(jnp.float32)
        + b2_bf16.astype(jnp.float32)
    )
    assert out_bf16.dtype == jnp.bfloat16
    assert jnp.allclose(out_bf16.astype(jnp.float32), ref_bf16, atol=2e-2, rtol=2e-2)

    print("KERNEL_OK")
</pallas_src>

<mosaic_0001>
module attributes {stable_mosaic.version = 11 : i64} {
  func.func @_pooler_kernel(%arg0: i32, %arg1: memref<2x8x32xf32, #tpu.memory_space<vmem>>, %arg2: memref<32x32xf32, #tpu.memory_space<vmem>>, %arg3: memref<1x32xf32, #tpu.memory_space<vmem>>, %arg4: memref<2x32xf32, #tpu.memory_space<vmem>>) attributes {dimension_semantics = [#tpu.dimension_semantics<parallel>], iteration_bounds = array<i64: 1>, scalar_prefetch = 0 : i64, scratch_operands = 0 : i64, tpu.core_type = #tpu.core_type<tc>, window_params = [{pipeline_mode = #tpu.pipeline_mode<synchronous>, transform_indices = @transform_0, window_bounds = array<i64: 2, 8, 32>}, {transform_indices = @transform_1, window_bounds = array<i64: 32, 32>}, {transform_indices = @transform_2, window_bounds = array<i64: 1, 32>}, {transform_indices = @transform_3, window_bounds = array<i64: 2, 32>}]} {
    %c0 = arith.constant 0 : index
    %c0_0 = arith.constant 0 : index
    %c0_1 = arith.constant 0 : index
    %0 = vector.load %arg1[%c0, %c0_0, %c0_1] : memref<2x8x32xf32, #tpu.memory_space<vmem>>, vector<2x1x32xf32>
    %1 = vector.shape_cast %0 : vector<2x1x32xf32> to vector<2x32xf32>
    %c0_2 = arith.constant 0 : index
    %c0_3 = arith.constant 0 : index
    %2 = vector.load %arg2[%c0_2, %c0_3] : memref<32x32xf32, #tpu.memory_space<vmem>>, vector<32x32xf32>
    %cst = arith.constant dense<0.000000e+00> : vector<2x32xf32>
    %3 = tpu.matmul %1, %2, %cst {dimension_numbers = #tpu.dot_dimension_numbers<[1], [0], [0], [1], [0, 0, 1, 1], [], []>, precision = #tpu.contract_precision<fp32>} : vector<2x32xf32>, vector<32x32xf32>, vector<2x32xf32> -> vector<2x32xf32>
    %c0_4 = arith.constant 0 : index
    %c0_5 = arith.constant 0 : index
    %4 = vector.load %arg3[%c0_4, %c0_5] : memref<1x32xf32, #tpu.memory_space<vmem>>, vector<1x32xf32>
    %5 = vector.broadcast %4 : vector<1x32xf32> to vector<2x32xf32>
    %6 = arith.addf %3, %5 : vector<2x32xf32>
    %7 = math.tanh %6 : vector<2x32xf32>
    %c0_6 = arith.constant 0 : index
    %c0_7 = arith.constant 0 : index
    %8 = vector.load %arg4[%c0_6, %c0_7] : memref<2x32xf32, #tpu.memory_space<vmem>>, vector<2x32xf32>
    tpu.vector_store %arg4[%c0_6, %c0_7], %7 {strides = array<i32>} : memref<2x32xf32, #tpu.memory_space<vmem>>, vector<2x32xf32>,
    return
  }
  func.func @transform_0(%arg0: i32) -> (i32, i32, i32) {
    %c0_i32 = arith.constant 0 : i32
    %c0_i32_0 = arith.constant 0 : i32
    %c0_i32_1 = arith.constant 0 : i32
    %c0_i32_2 = arith.constant 0 : i32
    return %c0_i32, %c0_i32_0, %c0_i32_1 : i32, i32, i32
  }
  func.func @transform_1(%arg0: i32) -> (i32, i32) {
    %c0_i32 = arith.constant 0 : i32
    %c0_i32_0 = arith.constant 0 : i32
    return %c0_i32, %arg0 : i32, i32
  }
  func.func @transform_2(%arg0: i32) -> (i32, i32) {
    %c0_i32 = arith.constant 0 : i32
    %c0_i32_0 = arith.constant 0 : i32
    return %c0_i32, %arg0 : i32, i32
  }
  func.func @transform_3(%arg0: i32) -> (i32, i32) {
    %c0_i32 = arith.constant 0 : i32
    %c0_i32_0 = arith.constant 0 : i32
    return %c0_i32, %arg0 : i32, i32
  }
}

</mosaic_0001>

<llo_original>
// kernel: tpu_custom_call.1
$region0: #{tpu_custom_call.1}
  #allocation0 [shape = 'u32[]', space=smem, size = 0x4, offset = 0x4, fixed_abs, tag = 'smem constant byte address 0x4 - core index']
  #allocation1 [shape = 'u32[144,128]{1,0:T(1,128)}', space=vmem, size = 0x12000, scoped, tag = 'internal scratch']
  %s0 = inlined_call_operand.hbm [shape: f32[2,8,32], index: 0, kind: input, shape index: {}]
  %s1 = inlined_call_operand.hbm [shape: f32[32,32], index: 1, kind: input, shape index: {}]
  %s2 = inlined_call_operand.vmem [shape: f32[1,32], index: 2, kind: input, shape index: {}]
  %s3 = inlined_call_operand.hbm [shape: f32[2,32], index: 3, kind: output, shape index: {}]
  %s4 = sld [smem:[#allocation0]]
  $region30: #{tpu_custom_call.1} parent=0
    _
  %s6 = ssub.s32 1, %s4
  %s7 = scalar_select 0, %s6, %s4
  $region1: #{tpu_custom_call.1} parent=0
    #allocation2 [shape = 'u8[8192]{0}', space=vmem, size = 0x2000, scoped, tag = 'input window, operand 0, single buffered']
    #allocation3 [shape = 's32[1]{0}', space=sflag, size = 0x4, scoped, tag = 'scoped memory for tpu_custom_call.1']
    #allocation4 [shape = 's32[1]{0}', space=sflag, size = 0x4, scoped, tag = 'scoped memory for tpu_custom_call.1']
    #allocation5 [shape = 'u8[16384]{0}', space=vmem, size = 0x4000, scoped, tag = 'input window, operand 1, single buffered']
    #allocation6 [shape = 's32[1]{0}', space=sflag, size = 0x4, scoped, tag = 'scoped memory for tpu_custom_call.1']
    #allocation7 [shape = 'u8[1024]{0}', space=vmem, size = 0x400, scoped, tag = 'output window, operand 0, single buffered']
    %8 = vsyncpa [#allocation3], 0
    %9 = vsyncpa [#allocation6], 0
    %10 = vsyncpa [#allocation4], 0
    // Predicated region
    $region2: #{tpu_custom_call.1} parent=1 // pred_check
      _
    $region3: #{tpu_custom_call.1} parent=1 // pred_check_branch
      %12 = sbr.rel (0) target = $region5
    $region4: #{tpu_custom_call.1} parent=1 // pred_region
      %s14 = ssub.s32 256, 256
      %15 = vsyncadd [#allocation3], %s14
      %s16 = sshll.u32 [#allocation2], 4
      %s17 = int_to_ptr.vmem [resolvable:$true] %s16
      %22 = dma.hbm_to_vmem [thread:$0]  %s0, 256, %s17, [#allocation3], 128, 128, 8
    $region5: #{tpu_custom_call.1} parent=1 // pred_fallthru
      _
    // Predicated region
    $region6: #{tpu_custom_call.1} parent=1 // pred_check
      _
    $region7: #{tpu_custom_call.1} parent=1 // pred_check_branch
      %24 = sbr.rel (0) target = $region9
    $region8: #{tpu_custom_call.1} parent=1 // pred_region
      %s26 = ssub.s32 512, 512
      %27 = vsyncadd [#allocation6], %s26
      %s28 = sshll.u32 [#allocation5], 4
      %s29 = int_to_ptr.vmem [resolvable:$true] %s28
      %34 = dma.hbm_to_vmem [thread:$0]  %s1, 512, %s29, [#allocation6], 128, 128, 8
    $region9: #{tpu_custom_call.1} parent=1 // pred_fallthru
      _
    // Predicated region
    $region10: #{tpu_custom_call.1} parent=1 // pred_check
      _
    $region11: #{tpu_custom_call.1} parent=1 // pred_check_branch
      %36 = sbr.rel (0) target = $region13
    $region12: #{tpu_custom_call.1} parent=1 // pred_region
      _
    $region13: #{tpu_custom_call.1} parent=1 // pred_fallthru
      _
    // Predicated region
    $region14: #{tpu_custom_call.1} parent=1 // pred_check
      _
    $region15: #{tpu_custom_call.1} parent=1 // pred_check_branch
      %38 = sbr.rel (0) target = $region17
    $region16: #{tpu_custom_call.1} parent=1 // pred_region
      %39 = dma.done [#allocation3], 256
    $region17: #{tpu_custom_call.1} parent=1 // pred_fallthru
      _
    // Predicated region
    $region18: #{tpu_custom_call.1} parent=1 // pred_check
      _
    $region19: #{tpu_custom_call.1} parent=1 // pred_check_branch
      %41 = sbr.rel (0) target = $region21
    $region20: #{tpu_custom_call.1} parent=1 // pred_region
      %42 = dma.done [#allocation6], 512
    $region21: #{tpu_custom_call.1} parent=1 // pred_fallthru
      _
    %v43 = vld [vmem:[#allocation2] sm:$0x1]
    %v44 = vld [vmem:[#allocation2 + $0x8] sm:$0x1]
    %v45 = vld [vmem:[#allocation5] sm:$0xff]
    %v46 = vld [vmem:[#allocation5 + $0x8] sm:$0xff]
    %v47 = vld [vmem:[#allocation5 + $0x10] sm:$0xff]
    %v48 = vld [vmem:[#allocation5 + $0x18] sm:$0xff]
    %v49 = vld [vmem:[%s2] sm:$0x1]
    %v51 = vlaneseq
    %v52 = vshrl.u32 %v51, 7
    %v53 = vsub.s32 0, %v52
    %v54 = vrot.slane %v49, %v53
    %v58 = vrot.slane %v44, 7
    %vm59 = vcmask 1041409
    %v60 = vsel %vm59, %v58, %v43
    %vm61 = vcmask 261120
    %v62 = vsel %vm61, %v60, 0
    %64 = vmatprep.subr.mxu0 0.0
    %65 = vmatpush1.msra.mxu0 0.0
    %66 = vmatprep.subr.mxu0 0.0
    %67 = vmatpush1.msra.mxu0 0.0
    %68 = vmatprep.subr.mxu0 0.0
    %69 = vmatpush1.msra.mxu0 0.0
    %70 = vmatprep.subr.mxu0 0.0
    %71 = vmatpush1.msra.mxu0 0.0
    %72 = vmatprep.subr.mxu0 0.0
    %73 = vmatpush1.msra.mxu0 0.0
    %74 = vmatprep.subr.mxu0 0.0
    %75 = vmatpush1.msra.mxu0 0.0
    %76 = vmatprep.subr.mxu0 0.0
    %77 = vmatpush1.msra.mxu0 0.0
    %78 = vmatprep.subr.mxu0 0.0
    %79 = vmatpush1.msra.mxu0 0.0
    %80 = vmatprep.subr.mxu0 0.0
    %81 = vmatpush1.msra.mxu0 0.0
    %82 = vmatprep.subr.mxu0 0.0
    %83 = vmatpush1.msra.mxu0 0.0
    %84 = vmatprep.subr.mxu0 0.0
    %85 = vmatpush1.msra.mxu0 0.0
    %86 = vmatprep.subr.mxu0 0.0
    %87 = vmatpush1.msra.mxu0 0.0
    %88 = vmatprep.subr.mxu0 0.0
    %v89 = vand.u32 %v48, 4294901760
    %90 = vmatpush1.msra.mxu0 %v89
    %91 = vmatprep.subr.mxu0 0.0
    %v92 = vand.u32 %v47, 4294901760
    %93 = vmatpush1.msra.mxu0 %v92
    %94 = vmatprep.subr.mxu0 0.0
    %v95 = vand.u32 %v46, 4294901760
    %96 = vmatpush1.msra.mxu0 %v95
    %97 = vmatprep.subr.mxu0 0.0
    %v98 = vand.u32 %v45, 4294901760
    %99 = vmatpush1.msra.mxu0 %v98
    %100 = vmatprep.subr.mxu0 0.0
    %101 = vmatpush2.msra.mxu0 0.0
    %102 = vmatprep.subr.mxu0 0.0
    %103 = vmatpush2.msra.mxu0 0.0
    %104 = vmatprep.subr.mxu0 0.0
    %105 = vmatpush2.msra.mxu0 0.0
    %106 = vmatprep.subr.mxu0 0.0
    %107 = vmatpush2.msra.mxu0 0.0
    %108 = vmatprep.subr.mxu0 0.0
    %109 = vmatpush2.msra.mxu0 0.0
    %110 = vmatprep.subr.mxu0 0.0
    %111 = vmatpush2.msra.mxu0 0.0
    %112 = vmatprep.subr.mxu0 0.0
    %113 = vmatpush2.msra.mxu0 0.0
    %114 = vmatprep.subr.mxu0 0.0
    %115 = vmatpush2.msra.mxu0 0.0
    %116 = vmatprep.subr.mxu0 0.0
    %117 = vmatpush2.msra.mxu0 0.0
    %118 = vmatprep.subr.mxu0 0.0
    %119 = vmatpush2.msra.mxu0 0.0
    %120 = vmatprep.subr.mxu0 0.0
    %121 = vmatpush2.msra.mxu0 0.0
    %122 = vmatprep.subr.mxu0 0.0
    %123 = vmatpush2.msra.mxu0 0.0
    %124 = vmatprep.subr.mxu0 0.0
    %125 = vmatpush2.msra.mxu0 0.0
    %126 = vmatprep.subr.mxu0 0.0
    %127 = vmatpush2.msra.mxu0 0.0
    %128 = vmatprep.subr.mxu0 0.0
    %129 = vmatpush2.msra.mxu0 0.0
    %130 = vmatprep.subr.mxu0 0.0
    %131 = vmatpush2.msra.mxu0 0.0
    %132 = vmatprep.mubr.f32.mxu0 0.0
    %v133 = vand.u32 %v62, 4294901760
    %v134 = vsub.f32 %v62, %v133
    %v135 = vand.u32 %v134, 4294901760
    %v136 = vsub.f32 %v134, %v135
    %v137 = vand.u32 %v136, 4294901760
    %138 = vmatmul.mubr.f32.gmra.mxu0 %v137
    %v139 = vpop.f32.mrf.mxu0
    %v140 = vadd.f32 %v54, %v139
    %v141 = vpop.f32.mrf.mxu0
    %142 = vdwg.mxu0
    %143 = vmatprep.subr.mxu0 0.0
    %144 = vmatpush1.msra.mxu0 0.0
    %145 = vmatprep.subr.mxu0 0.0
    %146 = vmatpush1.msra.mxu0 0.0
    %147 = vmatprep.subr.mxu0 0.0
    %148 = vmatpush1.msra.mxu0 0.0
    %149 = vmatprep.subr.mxu0 0.0
    %150 = vmatpush1.msra.mxu0 0.0
    %151 = vmatprep.subr.mxu0 0.0
    %152 = vmatpush1.msra.mxu0 0.0
    %153 = vmatprep.subr.mxu0 0.0
    %154 = vmatpush1.msra.mxu0 0.0
    %155 = vmatprep.subr.mxu0 0.0
    %156 = vmatpush1.msra.mxu0 0.0
    %157 = vmatprep.subr.mxu0 0.0
    %158 = vmatpush1.msra.mxu0 0.0
    %159 = vmatprep.subr.mxu0 0.0
    %160 = vmatpush1.msra.mxu0 0.0
    %161 = vmatprep.subr.mxu0 0.0
    %162 = vmatpush1.msra.mxu0 0.0
    %163 = vmatprep.subr.mxu0 0.0
    %164 = vmatpush1.msra.mxu0 0.0
    %165 = vmatprep.subr.mxu0 0.0
    %166 = vmatpush1.msra.mxu0 0.0
    %167 = vmatprep.subr.mxu0 0.0
    %v168 = vand.u32 %v48, 4294901760
    %v169 = vsub.f32 %v48, %v168
    %v170 = vand.u32 %v169, 4294901760
    %v171 = vsub.f32 %v169, %v170
    %v172 = vand.u32 %v171, 4294901760
    %173 = vmatpush1.msra.mxu0 %v172
    %174 = vmatprep.subr.mxu0 0.0
    %v175 = vand.u32 %v47, 4294901760
    %v176 = vsub.f32 %v47, %v175
    %v177 = vand.u32 %v176, 4294901760
    %v178 = vsub.f32 %v176, %v177
    %v179 = vand.u32 %v178, 4294901760
    %180 = vmatpush1.msra.mxu0 %v179
    %181 = vmatprep.subr.mxu0 0.0
    %v182 = vand.u32 %v46, 4294901760
    %v183 = vsub.f32 %v46, %v182
    %v184 = vand.u32 %v183, 4294901760
    %v185 = vsub.f32 %v183, %v184
    %v186 = vand.u32 %v185, 4294901760
    %187 = vmatpush1.msra.mxu0 %v186
    %188 = vmatprep.subr.mxu0 0.0
    %v189 = vand.u32 %v45, 4294901760
    %v190 = vsub.f32 %v45, %v189
    %v191 = vand.u32 %v190, 4294901760
    %v192 = vsub.f32 %v190, %v191
    %v193 = vand.u32 %v192, 4294901760
    %194 = vmatpush1.msra.mxu0 %v193
    %195 = vmatprep.subr.mxu0 0.0
    %196 = vmatpush2.msra.mxu0 0.0
    %197 = vmatprep.subr.mxu0 0.0
    %198 = vmatpush2.msra.mxu0 0.0
    %199 = vmatprep.subr.mxu0 0.0
    %200 = vmatpush2.msra.mxu0 0.0
    %201 = vmatprep.subr.mxu0 0.0
    %202 = vmatpush2.msra.mxu0 0.0
    %203 = vmatprep.subr.mxu0 0.0
    %204 = vmatpush2.msra.mxu0 0.0
    %205 = vmatprep.subr.mxu0 0.0
    %206 = vmatpush2.msra.mxu0 0.0
    %207 = vmatprep.subr.mxu0 0.0
    %208 = vmatpush2.msra.mxu0 0.0
    %209 = vmatprep.subr.mxu0 0.0
    %210 = vmatpush2.msra.mxu0 0.0
    %211 = vmatprep.subr.mxu0 0.0
    %212 = vmatpush2.msra.mxu0 0.0
    %213 = vmatprep.subr.mxu0 0.0
    %214 = vmatpush2.msra.mxu0 0.0
    %215 = vmatprep.subr.mxu0 0.0
    %216 = vmatpush2.msra.mxu0 0.0
    %217 = vmatprep.subr.mxu0 0.0
    %218 = vmatpush2.msra.mxu0 0.0
    %219 = vmatprep.subr.mxu0 0.0
    %220 = vmatpush2.msra.mxu0 0.0
    %221 = vmatprep.subr.mxu0 0.0
    %222 = vmatpush2.msra.mxu0 0.0
    %223 = vmatprep.subr.mxu0 0.0
    %224 = vmatpush2.msra.mxu0 0.0
    %225 = vmatprep.subr.mxu0 0.0
    %226 = vmatpush2.msra.mxu0 0.0
    %227 = vmatprep.mubr.f32.mxu0 0.0
    %v228 = vand.u32 %v62, 4294901760
    %229 = vmatmul.mubr.f32.gmra.mxu0 %v228
    %v230 = vpop.f32.mrf.mxu0
    %v231 = vadd.f32 %v140, %v230
    %v232 = vpop.f32.mrf.mxu0
    %233 = vdwg.mxu0
    %234 = vmatprep.subr.mxu0 0.0
    %235 = vmatpush1.msra.mxu0 0.0
    %236 = vmatprep.subr.mxu0 0.0
    %237 = vmatpush1.msra.mxu0 0.0
    %238 = vmatprep.subr.mxu0 0.0
    %239 = vmatpush1.msra.mxu0 0.0
    %240 = vmatprep.subr.mxu0 0.0
    %241 = vmatpush1.msra.mxu0 0.0
    %242 = vmatprep.subr.mxu0 0.0
    %243 = vmatpush1.msra.mxu0 0.0
    %244 = vmatprep.subr.mxu0 0.0
    %245 = vmatpush1.msra.mxu0 0.0
    %246 = vmatprep.subr.mxu0 0.0
    %247 = vmatpush1.msra.mxu0 0.0
    %248 = vmatprep.subr.mxu0 0.0
    %249 = vmatpush1.msra.mxu0 0.0
    %250 = vmatprep.subr.mxu0 0.0
    %251 = vmatpush1.msra.mxu0 0.0
    %252 = vmatprep.subr.mxu0 0.0
    %253 = vmatpush1.msra.mxu0 0.0
    %254 = vmatprep.subr.mxu0 0.0
    %255 = vmatpush1.msra.mxu0 0.0
    %256 = vmatprep.subr.mxu0 0.0
    %257 = vmatpush1.msra.mxu0 0.0
    %258 = vmatprep.subr.mxu0 0.0
    %v259 = vand.u32 %v48, 4294901760
    %v260 = vsub.f32 %v48, %v259
    %261 = vmatpush1.msra.mxu0 %v260
    %262 = vmatprep.subr.mxu0 0.0
    %v263 = vand.u32 %v47, 4294901760
    %v264 = vsub.f32 %v47, %v263
    %265 = vmatpush1.msra.mxu0 %v264
    %266 = vmatprep.subr.mxu0 0.0
    %v267 = vand.u32 %v46, 4294901760
    %v268 = vsub.f32 %v46, %v267
    %269 = vmatpush1.msra.mxu0 %v268
    %270 = vmatprep.subr.mxu0 0.0
    %v271 = vand.u32 %v45, 4294901760
    %v272 = vsub.f32 %v45, %v271
    %273 = vmatpush1.msra.mxu0 %v272
    %274 = vmatprep.subr.mxu0 0.0
    %275 = vmatpush2.msra.mxu0 0.0
    %276 = vmatprep.subr.mxu0 0.0
    %277 = vmatpush2.msra.mxu0 0.0
    %278 = vmatprep.subr.mxu0 0.0
    %279 = vmatpush2.msra.mxu0 0.0
    %280 = vmatprep.subr.mxu0 0.0
    %281 = vmatpush2.msra.mxu0 0.0
    %282 = vmatprep.subr.mxu0 0.0
    %283 = vmatpush2.msra.mxu0 0.0
    %284 = vmatprep.subr.mxu0 0.0
    %285 = vmatpush2.msra.mxu0 0.0
    %286 = vmatprep.subr.mxu0 0.0
    %287 = vmatpush2.msra.mxu0 0.0
    %288 = vmatprep.subr.mxu0 0.0
    %289 = vmatpush2.msra.mxu0 0.0
    %290 = vmatprep.subr.mxu0 0.0
    %291 = vmatpush2.msra.mxu0 0.0
    %292 = vmatprep.subr.mxu0 0.0
    %293 = vmatpush2.msra.mxu0 0.0
    %294 = vmatprep.subr.mxu0 0.0
    %295 = vmatpush2.msra.mxu0 0.0
    %296 = vmatprep.subr.mxu0 0.0
    %297 = vmatpush2.msra.mxu0 0.0
    %298 = vmatprep.subr.mxu0 0.0
    %299 = vmatpush2.msra.mxu0 0.0
    %300 = vmatprep.subr.mxu0 0.0
    %301 = vmatpush2.msra.mxu0 0.0
    %302 = vmatprep.subr.mxu0 0.0
    %303 = vmatpush2.msra.mxu0 0.0
    %304 = vmatprep.subr.mxu0 0.0
    %305 = vmatpush2.msra.mxu0 0.0
    %306 = vmatprep.mubr.f32.mxu0 0.0
    %v307 = vand.u32 %v62, 4294901760
    %v308 = vsub.f32 %v62, %v307
    %309 = vmatmul.mubr.f32.gmra.mxu0 %v308
    %v310 = vpop.f32.mrf.mxu0
    %v311 = vadd.f32 %v231, %v310
    %v312 = vpop.f32.mrf.mxu0
    %313 = vdwg.mxu0
    %314 = vmatprep.subr.mxu0 0.0
    %315 = vmatpush1.msra.mxu0 0.0
    %316 = vmatprep.subr.mxu0 0.0
    %317 = vmatpush1.msra.mxu0 0.0
    %318 = vmatprep.subr.mxu0 0.0
    %319 = vmatpush1.msra.mxu0 0.0
    %320 = vmatprep.subr.mxu0 0.0
    %321 = vmatpush1.msra.mxu0 0.0
    %322 = vmatprep.subr.mxu0 0.0
    %323 = vmatpush1.msra.mxu0 0.0
    %324 = vmatprep.subr.mxu0 0.0
    %325 = vmatpush1.msra.mxu0 0.0
    %326 = vmatprep.subr.mxu0 0.0
    %327 = vmatpush1.msra.mxu0 0.0
    %328 = vmatprep.subr.mxu0 0.0
    %329 = vmatpush1.msra.mxu0 0.0
    %330 = vmatprep.subr.mxu0 0.0
    %331 = vmatpush1.msra.mxu0 0.0
    %332 = vmatprep.subr.mxu0 0.0
    %333 = vmatpush1.msra.mxu0 0.0
    %334 = vmatprep.subr.mxu0 0.0
    %335 = vmatpush1.msra.mxu0 0.0
    %336 = vmatprep.subr.mxu0 0.0
    %337 = vmatpush1.msra.mxu0 0.0
    %338 = vmatprep.subr.mxu0 0.0
    %v339 = vand.u32 %v48, 4294901760
    %340 = vmatpush1.msra.mxu0 %v339
    %341 = vmatprep.subr.mxu0 0.0
    %v342 = vand.u32 %v47, 4294901760
    %343 = vmatpush1.msra.mxu0 %v342
    %344 = vmatprep.subr.mxu0 0.0
    %v345 = vand.u32 %v46, 4294901760
    %346 = vmatpush1.msra.mxu0 %v345
    %347 = vmatprep.subr.mxu0 0.0
    %v348 = vand.u32 %v45, 4294901760
    %349 = vmatpush1.msra.mxu0 %v348
    %350 = vmatprep.subr.mxu0 0.0
    %351 = vmatpush2.msra.mxu0 0.0
    %352 = vmatprep.subr.mxu0 0.0
    %353 = vmatpush2.msra.mxu0 0.0
    %354 = vmatprep.subr.mxu0 0.0
    %355 = vmatpush2.msra.mxu0 0.0
    %356 = vmatprep.subr.mxu0 0.0
    %357 = vmatpush2.msra.mxu0 0.0
    %358 = vmatprep.subr.mxu0 0.0
    %359 = vmatpush2.msra.mxu0 0.0
    %360 = vmatprep.subr.mxu0 0.0
    %361 = vmatpush2.msra.mxu0 0.0
    %362 = vmatprep.subr.mxu0 0.0
    %363 = vmatpush2.msra.mxu0 0.0
    %364 = vmatprep.subr.mxu0 0.0
    %365 = vmatpush2.msra.mxu0 0.0
    %366 = vmatprep.subr.mxu0 0.0
    %367 = vmatpush2.msra.mxu0 0.0
    %368 = vmatprep.subr.mxu0 0.0
    %369 = vmatpush2.msra.mxu0 0.0
    %370 = vmatprep.subr.mxu0 0.0
    %371 = vmatpush2.msra.mxu0 0.0
    %372 = vmatprep.subr.mxu0 0.0
    %373 = vmatpush2.msra.mxu0 0.0
    %374 = vmatprep.subr.mxu0 0.0
    %375 = vmatpush2.msra.mxu0 0.0
    %376 = vmatprep.subr.mxu0 0.0
    %377 = vmatpush2.msra.mxu0 0.0
    %378 = vmatprep.subr.mxu0 0.0
    %379 = vmatpush2.msra.mxu0 0.0
    %380 = vmatprep.subr.mxu0 0.0
    %381 = vmatpush2.msra.mxu0 0.0
    %382 = vmatprep.mubr.f32.mxu0 0.0
    %v383 = vand.u32 %v62, 4294901760
    %v384 = vsub.f32 %v62, %v383
    %v385 = vand.u32 %v384, 4294901760
    %386 = vmatmul.mubr.f32.gmra.mxu0 %v385
    %v387 = vpop.f32.mrf.mxu0
    %v388 = vadd.f32 %v311, %v387
    %v389 = vpop.f32.mrf.mxu0
    %390 = vdwg.mxu0
    %391 = vmatprep.subr.mxu0 0.0
    %392 = vmatpush1.msra.mxu0 0.0
    %393 = vmatprep.subr.mxu0 0.0
    %394 = vmatpush1.msra.mxu0 0.0
    %395 = vmatprep.subr.mxu0 0.0
    %396 = vmatpush1.msra.mxu0 0.0
    %397 = vmatprep.subr.mxu0 0.0
    %398 = vmatpush1.msra.mxu0 0.0
    %399 = vmatprep.subr.mxu0 0.0
    %400 = vmatpush1.msra.mxu0 0.0
    %401 = vmatprep.subr.mxu0 0.0
    %402 = vmatpush1.msra.mxu0 0.0
    %403 = vmatprep.subr.mxu0 0.0
    %404 = vmatpush1.msra.mxu0 0.0
    %405 = vmatprep.subr.mxu0 0.0
    %406 = vmatpush1.msra.mxu0 0.0
    %407 = vmatprep.subr.mxu0 0.0
    %408 = vmatpush1.msra.mxu0 0.0
    %409 = vmatprep.subr.mxu0 0.0
    %410 = vmatpush1.msra.mxu0 0.0
    %411 = vmatprep.subr.mxu0 0.0
    %412 = vmatpush1.msra.mxu0 0.0
    %413 = vmatprep.subr.mxu0 0.0
    %414 = vmatpush1.msra.mxu0 0.0
    %415 = vmatprep.subr.mxu0 0.0
    %v416 = vand.u32 %v48, 4294901760
    %v417 = vsub.f32 %v48, %v416
    %v418 = vand.u32 %v417, 4294901760
    %419 = vmatpush1.msra.mxu0 %v418
    %420 = vmatprep.subr.mxu0 0.0
    %v421 = vand.u32 %v47, 4294901760
    %v422 = vsub.f32 %v47, %v421
    %v423 = vand.u32 %v422, 4294901760
    %424 = vmatpush1.msra.mxu0 %v423
    %425 = vmatprep.subr.mxu0 0.0
    %v426 = vand.u32 %v46, 4294901760
    %v427 = vsub.f32 %v46, %v426
    %v428 = vand.u32 %v427, 4294901760
    %429 = vmatpush1.msra.mxu0 %v428
    %430 = vmatprep.subr.mxu0 0.0
    %v431 = vand.u32 %v45, 4294901760
    %v432 = vsub.f32 %v45, %v431
    %v433 = vand.u32 %v432, 4294901760
    %434 = vmatpush1.msra.mxu0 %v433
    %435 = vmatprep.subr.mxu0 0.0
    %436 = vmatpush2.msra.mxu0 0.0
    %437 = vmatprep.subr.mxu0 0.0
    %438 = vmatpush2.msra.mxu0 0.0
    %439 = vmatprep.subr.mxu0 0.0
    %440 = vmatpush2.msra.mxu0 0.0
    %441 = vmatprep.subr.mxu0 0.0
    %442 = vmatpush2.msra.mxu0 0.0
    %443 = vmatprep.subr.mxu0 0.0
    %444 = vmatpush2.msra.mxu0 0.0
    %445 = vmatprep.subr.mxu0 0.0
    %446 = vmatpush2.msra.mxu0 0.0
    %447 = vmatprep.subr.mxu0 0.0
    %448 = vmatpush2.msra.mxu0 0.0
    %449 = vmatprep.subr.mxu0 0.0
    %450 = vmatpush2.msra.mxu0 0.0
    %451 = vmatprep.subr.mxu0 0.0
    %452 = vmatpush2.msra.mxu0 0.0
    %453 = vmatprep.subr.mxu0 0.0
    %454 = vmatpush2.msra.mxu0 0.0
    %455 = vmatprep.subr.mxu0 0.0
    %456 = vmatpush2.msra.mxu0 0.0
    %457 = vmatprep.subr.mxu0 0.0
    %458 = vmatpush2.msra.mxu0 0.0
    %459 = vmatprep.subr.mxu0 0.0
    %460 = vmatpush2.msra.mxu0 0.0
    %461 = vmatprep.subr.mxu0 0.0
    %462 = vmatpush2.msra.mxu0 0.0
    %463 = vmatprep.subr.mxu0 0.0
    %464 = vmatpush2.msra.mxu0 0.0
    %465 = vmatprep.subr.mxu0 0.0
    %466 = vmatpush2.msra.mxu0 0.0
    %467 = vmatprep.mubr.f32.mxu0 0.0
    %v468 = vand.u32 %v62, 4294901760
    %469 = vmatmul.mubr.f32.gmra.mxu0 %v468
    %v470 = vpop.f32.mrf.mxu0
    %v471 = vadd.f32 %v388, %v470
    %v472 = vpop.f32.mrf.mxu0
    %473 = vdwg.mxu0
    %474 = vmatprep.subr.mxu0 0.0
    %475 = vmatpush1.msra.mxu0 0.0
    %476 = vmatprep.subr.mxu0 0.0
    %477 = vmatpush1.msra.mxu0 0.0
    %478 = vmatprep.subr.mxu0 0.0
    %479 = vmatpush1.msra.mxu0 0.0
    %480 = vmatprep.subr.mxu0 0.0
    %481 = vmatpush1.msra.mxu0 0.0
    %482 = vmatprep.subr.mxu0 0.0
    %483 = vmatpush1.msra.mxu0 0.0
    %484 = vmatprep.subr.mxu0 0.0
    %485 = vmatpush1.msra.mxu0 0.0
    %486 = vmatprep.subr.mxu0 0.0
    %487 = vmatpush1.msra.mxu0 0.0
    %488 = vmatprep.subr.mxu0 0.0
    %489 = vmatpush1.msra.mxu0 0.0
    %490 = vmatprep.subr.mxu0 0.0
    %491 = vmatpush1.msra.mxu0 0.0
    %492 = vmatprep.subr.mxu0 0.0
    %493 = vmatpush1.msra.mxu0 0.0
    %494 = vmatprep.subr.mxu0 0.0
    %495 = vmatpush1.msra.mxu0 0.0
    %496 = vmatprep.subr.mxu0 0.0
    %497 = vmatpush1.msra.mxu0 0.0
    %498 = vmatprep.subr.mxu0 0.0
    %v499 = vand.u32 %v48, 4294901760
    %500 = vmatpush1.msra.mxu0 %v499
    %501 = vmatprep.subr.mxu0 0.0
    %v502 = vand.u32 %v47, 4294901760
    %503 = vmatpush1.msra.mxu0 %v502
    %504 = vmatprep.subr.mxu0 0.0
    %v505 = vand.u32 %v46, 4294901760
    %506 = vmatpush1.msra.mxu0 %v505
    %507 = vmatprep.subr.mxu0 0.0
    %v508 = vand.u32 %v45, 4294901760
    %509 = vmatpush1.msra.mxu0 %v508
    %510 = vmatprep.subr.mxu0 0.0
    %511 = vmatpush2.msra.mxu0 0.0
    %512 = vmatprep.subr.mxu0 0.0
    %513 = vmatpush2.msra.mxu0 0.0
    %514 = vmatprep.subr.mxu0 0.0
    %515 = vmatpush2.msra.mxu0 0.0
    %516 = vmatprep.subr.mxu0 0.0
    %517 = vmatpush2.msra.mxu0 0.0
    %518 = vmatprep.subr.mxu0 0.0
    %519 = vmatpush2.msra.mxu0 0.0
    %520 = vmatprep.subr.mxu0 0.0
    %521 = vmatpush2.msra.mxu0 0.0
    %522 = vmatprep.subr.mxu0 0.0
    %523 = vmatpush2.msra.mxu0 0.0
    %524 = vmatprep.subr.mxu0 0.0
    %525 = vmatpush2.msra.mxu0 0.0
    %526 = vmatprep.subr.mxu0 0.0
    %527 = vmatpush2.msra.mxu0 0.0
    %528 = vmatprep.subr.mxu0 0.0
    %529 = vmatpush2.msra.mxu0 0.0
    %530 = vmatprep.subr.mxu0 0.0
    %531 = vmatpush2.msra.mxu0 0.0
    %532 = vmatprep.subr.mxu0 0.0
    %533 = vmatpush2.msra.mxu0 0.0
    %534 = vmatprep.subr.mxu0 0.0
    %535 = vmatpush2.msra.mxu0 0.0
    %536 = vmatprep.subr.mxu0 0.0
    %537 = vmatpush2.msra.mxu0 0.0
    %538 = vmatprep.subr.mxu0 0.0
    %539 = vmatpush2.msra.mxu0 0.0
    %540 = vmatprep.subr.mxu0 0.0
    %541 = vmatpush2.msra.mxu0 0.0
    %542 = vmatprep.mubr.f32.mxu0 0.0
    %v543 = vand.u32 %v62, 4294901760
    %544 = vmatmul.mubr.f32.gmra.mxu0 %v543
    %v545 = vpop.f32.mrf.mxu0
    %v546 = vadd.f32 %v471, %v545
    %v547 = vpop.f32.mrf.mxu0
    %548 = vdwg.mxu0
    %v549 = vtanh.pop %v546
    %vm550 = vcmask 254976
    %551 = vst.msk [vmem:[#allocation7] sm:$0x3] %vm550, %v549
    // Predicated region
    $region22: #{tpu_custom_call.1} parent=1 // pred_check
      _
    $region23: #{tpu_custom_call.1} parent=1 // pred_check_branch
      %553 = sbr.rel (0) target = $region25
    $region24: #{tpu_custom_call.1} parent=1 // pred_region
      %s555 = ssub.s32 32, 32
      %556 = vsyncadd [#allocation4], %s555
      %s558 = sshll.u32 [#allocation7], 4
      %s559 = int_to_ptr.vmem [resolvable:$true] %s558
      %561 = dma.vmem_to_hbm [thread:$0]  %s559, 32, %s3, [#allocation4]
    $region25: #{tpu_custom_call.1} parent=1 // pred_fallthru
      _
    // Predicated region
    $region26: #{tpu_custom_call.1} parent=1 // pred_check
      _
    $region27: #{tpu_custom_call.1} parent=1 // pred_check_branch
      %563 = sbr.rel (0) target = $region29
    $region28: #{tpu_custom_call.1} parent=1 // pred_region
      %564 = dma.done [#allocation4], 32
    $region29: #{tpu_custom_call.1} parent=1 // pred_fallthru
      _
    %565 = vsyncpa [#allocation3], 1
    %566 = vsyncpa [#allocation6], 1
    %567 = vsyncpa [#allocation4], 1

</llo_original>
